<compile_context>
chip_gen: v7x
topology: tpu7x:2x2x1
jax: 0.10.0
libtpu: 0.0.40
codegen_flags: <defaults>
</compile_context>

<pallas_src>
import jax
import jax.numpy as jnp
from jax import lax
from jax.experimental import pallas as pl
from jax.experimental.pallas import tpu as pltpu

MARGIN = 2.0
_PAIRWISE_EPS = 1e-6  # matches torch.nn.functional.pairwise_distance default eps

# Per-pipeline-slot VMEM budget for the input blocks (2 feature tiles + label tile).
# ~8 MiB/slot * 2 slots (double buffering) + headroom stays far below v7x's 64 MiB
# physical VMEM.  On v6e (128 MiB VMEM) this could be raised to 16-32 MiB/slot
# and/or the feature specs given pipeline_mode=pl.Buffered(3), but measured
# streaming kernels are already near the HBM roofline at ~2-4 MB tiles.
_PER_SLOT_VMEM_BUDGET = 8 * 1024 * 1024

# Leading "parallel" grid axis: sharded across the 2 TensorCores on v7x megacore,
# plain (cheap) outer loop on single-TC chips (v5e/v6e).
_NUM_CORE_GROUPS = 2


def _round_up(x, m):
    return ((x + m - 1) // m) * m


def _make_contrastive_kernel(B, TB, blocks_per_core, margin, eps):
    total_rows_covered = _NUM_CORE_GROUPS * blocks_per_core * TB
    need_row_mask = total_rows_covered != B
    inv_b = 1.0 / float(B)

    def kernel(o1_ref, o2_ref, lbl_ref, out_ref, acc_ref):
        c = pl.program_id(0)           # core group (parallel)
        i = pl.program_id(1)           # batch block within the core group (arbitrary)

        @pl.when(i == 0)
        def _init():
            acc_ref[...] = jnp.zeros_like(acc_ref)

        # (TB, D) feature tiles streamed in native dtype; compute in f32.
        # eps is added elementwise as in F.pairwise_distance.
        o1 = o1_ref[...].astype(jnp.float32)
        o2 = o2_ref[...].astype(jnp.float32)
        diff = o1 - o2 + eps
        lbl = lbl_ref[...].astype(jnp.float32)               # (TB, 1)

        # dist^2 reused directly for the positive term (no sqrt->square round trip).
        sq = jnp.sum(diff * diff, axis=-1, keepdims=True)    # (TB, 1)
        dist = jnp.sqrt(sq)                                  # EUP slot
        hinge = jnp.maximum(margin - dist, 0.0)
        per_ex = lbl * sq + (1.0 - lbl) * (hinge * hinge)    # (TB, 1)

        if need_row_mask:
            # Mask only the cheap (TB,1) per-example vector.  Rows whose *logical*
            # index is >= B (ragged tail or a fully-OOB block that got clamped in
            # the index_map) contribute exactly 0; the select also discards any
            # NaN/garbage produced from those rows.
            row0 = (c * blocks_per_core + i) * TB
            row_ids = lax.broadcasted_iota(jnp.int32, (TB, 1), 0) + row0
            per_ex = jnp.where(row_ids < B, per_ex, 0.0)

        acc_ref[...] += jnp.sum(per_ex, keepdims=True)       # (1, 1) running sum

        @pl.when(i == pl.num_programs(1) - 1)
        def _finalize():
            out_ref[...] = jnp.reshape(acc_ref[...] * inv_b, (1, 1, 1))

    return kernel


def contrastive_loss(output1, output2, label, *, margin=MARGIN, block_rows=None):
    """output1, output2: (B, D) float; label: (B, 1) or (B,) float. Returns scalar loss."""
    output1 = jnp.asarray(output1)
    output2 = jnp.asarray(output2)
    label = jnp.asarray(label)
    if not jnp.issubdtype(output1.dtype, jnp.floating):
        output1 = output1.astype(jnp.float32)
    if output2.dtype != output1.dtype:
        output2 = output2.astype(output1.dtype)
    if label.ndim == 1:
        label = label[:, None]

    B, D = output1.shape
    feat_itemsize = jnp.dtype(output1.dtype).itemsize
    lbl_itemsize = max(4, jnp.dtype(label.dtype).itemsize)

    # VMEM footprint per batch row per pipeline slot:
    #   2 feature blocks (lane-padded to a multiple of 128 *in VMEM only*) plus the
    #   (TB,1) label block (pads to 128 lanes in VMEM).  HBM traffic is unpadded.
    d_vmem = max(128, _round_up(D, 128))
    bytes_per_row = 2 * d_vmem * feat_itemsize + 128 * lbl_itemsize

    if block_rows is None:
        tb = _PER_SLOT_VMEM_BUDGET // bytes_per_row
        tb = max(8, (tb // 8) * 8)
        # Minimum grid length for big batches: keep >= ~4 batch blocks so the
        # pipeline overlaps DMA/compute and the v7x core split has work per core.
        min_blocks = _NUM_CORE_GROUPS * 2
        if B >= min_blocks * 256:
            tb = min(tb, max(8, _round_up(pl.cdiv(B, min_blocks), 8)))
    else:
        tb = max(8, (int(block_rows) // 8) * 8)

    if tb >= B:
        TB = B                      # full-extent block is always legal
    else:
        TB = tb                     # sublane-aligned tile; ragged tail masked

    num_batch_blocks = pl.cdiv(B, TB)
    blocks_per_core = pl.cdiv(num_batch_blocks, _NUM_CORE_GROUPS)
    last_block = num_batch_blocks - 1

    def feat_index_map(c, i):
        # Clamp so a core group's over-covered tail never DMAs past the array;
        # those rows are exactly masked via their logical row ids in the kernel.
        return (jnp.minimum(c * blocks_per_core + i, last_block), 0)

    kernel = _make_contrastive_kernel(B, TB, blocks_per_core, float(margin),
                                      _PAIRWISE_EPS)

    # Scoped-VMEM limit: 2 pipeline slots + headroom, clamped to [32, 48] MiB so it
    # exceeds the 16 MiB v5e default but leaves room for Mosaic internal scratch on
    # the 64 MiB v7x part.
    slot_bytes = TB * bytes_per_row
    vmem_limit = int(min(48 << 20, max(32 << 20, 2 * slot_bytes + (8 << 20))))

    out = pl.pallas_call(
        kernel,
        out_shape=jax.ShapeDtypeStruct((_NUM_CORE_GROUPS, 1, 1), jnp.float32),
        grid_spec=pltpu.PrefetchScalarGridSpec(
            num_scalar_prefetch=0,
            grid=(_NUM_CORE_GROUPS, blocks_per_core),
            in_specs=[
                pl.BlockSpec((TB, D), feat_index_map),
                pl.BlockSpec((TB, D), feat_index_map),
                pl.BlockSpec((TB, 1), feat_index_map),
            ],
            out_specs=pl.BlockSpec((1, 1, 1), lambda c, i: (c, 0, 0)),
            scratch_shapes=[pltpu.VMEM((1, 1), jnp.float32)],
        ),
        compiler_params=pltpu.CompilerParams(
            # core-group axis parallel (v7x megacore split), batch-block axis is the
            # reduction carried in the resident accumulator.
            dimension_semantics=("parallel", "arbitrary"),
            vmem_limit_bytes=vmem_limit,
        ),
    )(output1, output2, label)
    # Each core group's partial is already divided by the true B; sum them.
    return jnp.sum(out)


def _reference_loss(output1, output2, label, margin=MARGIN):
    o1 = jnp.asarray(output1, jnp.float32)
    o2 = jnp.asarray(output2, jnp.float32)
    lbl = jnp.asarray(label, jnp.float32)
    if lbl.ndim == 2:
        lbl = jnp.squeeze(lbl, axis=1)
    d = jnp.sqrt(jnp.sum((o1 - o2 + _PAIRWISE_EPS) ** 2, axis=-1))
    return jnp.mean(lbl * d**2 + (1.0 - lbl) * jnp.maximum(margin - d, 0.0) ** 2)


if __name__ == "__main__":
    key = jax.random.PRNGKey(0)

    # Test 1: small shapes implied by the module (B=8 pairs of D=32 embeddings).
    k1, k2, k3 = jax.random.split(key, 3)
    B, D = 8, 32
    o1 = jax.random.normal(k1, (B, D), dtype=jnp.float32)
    o2 = jax.random.normal(k2, (B, D), dtype=jnp.float32)
    lbl = jax.random.bernoulli(k3, 0.5, (B, 1)).astype(jnp.float32)

    loss = jax.block_until_ready(contrastive_loss(o1, o2, lbl))
    ref = _reference_loss(o1, o2, lbl)
    assert jnp.allclose(loss, ref, rtol=1e-5, atol=1e-5), (loss, ref)

    # Test 2: multi-tile grid with a ragged last tile and an over-covered core group
    # (exercises block-index clamping + per-example row masking).
    k4, k5, k6 = jax.random.split(jax.random.PRNGKey(0), 3)
    B2, D2 = 20, 32
    o1b = jax.random.normal(k4, (B2, D2), dtype=jnp.float32)
    o2b = jax.random.normal(k5, (B2, D2), dtype=jnp.float32)
    lblb = jax.random.bernoulli(k6, 0.5, (B2, 1)).astype(jnp.float32)

    loss2 = jax.block_until_ready(contrastive_loss(o1b, o2b, lblb, block_rows=8))
    ref2 = _reference_loss(o1b, o2b, lblb)
    assert jnp.allclose(loss2, ref2, rtol=1e-5, atol=1e-5), (loss2, ref2)

    # Test 3: bf16 inputs stream at half the HBM bytes; cast to f32 happens in-kernel.
    o1c = o1.astype(jnp.bfloat16)
    o2c = o2.astype(jnp.bfloat16)
    loss3 = jax.block_until_ready(contrastive_loss(o1c, o2c, lbl))
    ref3 = _reference_loss(o1c, o2c, lbl)
    assert jnp.allclose(loss3, ref3, rtol=1e-4, atol=1e-4), (loss3, ref3)

    print("KERNEL_OK")
</pallas_src>

<mosaic_0001>
module attributes {stable_mosaic.version = 11 : i64} {
  func.func @kernel(%arg0: i32, %arg1: i32, %arg2: memref<8x32xf32, #tpu.memory_space<vmem>>, %arg3: memref<8x32xf32, #tpu.memory_space<vmem>>, %arg4: memref<8x1xf32, #tpu.memory_space<vmem>>, %arg5: memref<1x1x1xf32, #tpu.memory_space<vmem>>, %arg6: memref<1x1xf32, #tpu.memory_space<vmem>>) attributes {dimension_semantics = [#tpu.dimension_semantics<parallel>, #tpu.dimension_semantics<arbitrary>], iteration_bounds = array<i64: 2, 1>, scalar_prefetch = 0 : i64, scratch_operands = 1 : i64, tpu.core_type = #tpu.core_type<tc>, window_params = [{transform_indices = @transform_0, window_bounds = array<i64: 8, 32>}, {transform_indices = @transform_1, window_bounds = array<i64: 8, 32>}, {transform_indices = @transform_2, window_bounds = array<i64: 8, 1>}, {transform_indices = @transform_3, window_bounds = array<i64: 1, 1, 1>}]} {
    %c0_i32 = arith.constant 0 : i32
    %0 = arith.cmpi eq, %arg1, %c0_i32 : i32
    %1 = arith.extui %0 : i1 to i32
    %c0_i32_0 = arith.constant 0 : i32
    %2 = arith.cmpi ne, %1, %c0_i32_0 : i32
    scf.if %2 {
      %cst_19 = arith.constant 0.000000e+00 : f32
      %44 = vector.broadcast %cst_19 : f32 to vector<1x1xf32>
      %c0_20 = arith.constant 0 : index
      %c0_21 = arith.constant 0 : index
      %45 = vector.load %arg6[%c0_20, %c0_21] : memref<1x1xf32, #tpu.memory_space<vmem>>, vector<1x1xf32>
      tpu.vector_store %arg6[%c0_20, %c0_21], %44 {strides = array<i32>} : memref<1x1xf32, #tpu.memory_space<vmem>>, vector<1x1xf32>,
    } else {
    }
    %c0 = arith.constant 0 : index
    %c0_1 = arith.constant 0 : index
    %3 = vector.load %arg2[%c0, %c0_1] : memref<8x32xf32, #tpu.memory_space<vmem>>, vector<8x32xf32>
    %c0_2 = arith.constant 0 : index
    %c0_3 = arith.constant 0 : index
    %4 = vector.load %arg3[%c0_2, %c0_3] : memref<8x32xf32, #tpu.memory_space<vmem>>, vector<8x32xf32>
    %5 = arith.subf %3, %4 : vector<8x32xf32>
    %cst = arith.constant 9.99999997E-7 : f32
    %6 = vector.broadcast %cst : f32 to vector<8x32xf32>
    %7 = arith.addf %5, %6 : vector<8x32xf32>
    %c0_4 = arith.constant 0 : index
    %c0_5 = arith.constant 0 : index
    %8 = vector.load %arg4[%c0_4, %c0_5] : memref<8x1xf32, #tpu.memory_space<vmem>>, vector<8x1xf32>
    %9 = arith.mulf %7, %7 : vector<8x32xf32>
    %cst_6 = arith.constant dense<0.000000e+00> : vector<8xf32>
    %10 = vector.multi_reduction <add>, %9, %cst_6 [1] : vector<8x32xf32> to vector<8xf32>
    %11 = vector.shape_cast %10 : vector<8xf32> to vector<8x1xf32>
    %12 = math.sqrt %11 : vector<8x1xf32>
    %cst_7 = arith.constant 2.000000e+00 : f32
    %13 = vector.broadcast %cst_7 : f32 to vector<8x1xf32>
    %14 = arith.subf %13, %12 : vector<8x1xf32>
    %cst_8 = arith.constant 0.000000e+00 : f32
    %15 = vector.broadcast %cst_8 : f32 to vector<8x1xf32>
    %16 = arith.maximumf %14, %15 : vector<8x1xf32>
    %17 = arith.mulf %8, %11 : vector<8x1xf32>
    %cst_9 = arith.constant 1.000000e+00 : f32
    %18 = vector.broadcast %cst_9 : f32 to vector<8x1xf32>
    %19 = arith.subf %18, %8 : vector<8x1xf32>
    %20 = arith.mulf %16, %16 : vector<8x1xf32>
    %21 = arith.mulf %19, %20 : vector<8x1xf32>
    %22 = arith.addf %17, %21 : vector<8x1xf32>
    %c1_i32 = arith.constant 1 : i32
    %23 = arith.muli %arg0, %c1_i32 : i32
    %24 = arith.addi %23, %arg1 : i32
    %c8_i32 = arith.constant 8 : i32
    %25 = arith.muli %24, %c8_i32 : i32
    %26 = tpu.iota {dimensions = array<i32: 0>} : vector<8x1xi32>
    %27 = vector.broadcast %25 : i32 to vector<8x1xi32>
    %28 = arith.addi %26, %27 : vector<8x1xi32>
    %c8_i32_10 = arith.constant 8 : i32
    %29 = vector.broadcast %c8_i32_10 : i32 to vector<8x1xi32>
    %30 = arith.cmpi slt, %28, %29 : vector<8x1xi32>
    %cst_11 = arith.constant 0.000000e+00 : f32
    %31 = vector.broadcast %cst_11 : f32 to vector<8x1xf32>
    %32 = arith.select %30, %22, %31 : vector<8x1xi1>, vector<8x1xf32>
    %c0_12 = arith.constant 0 : index
    %c0_13 = arith.constant 0 : index
    %33 = vector.load %arg6[%c0_12, %c0_13] : memref<1x1xf32, #tpu.memory_space<vmem>>, vector<1x1xf32>
    %34 = vector.shape_cast %32 : vector<8x1xf32> to vector<1x8x1xf32>
    %cst_14 = arith.constant dense<0.000000e+00> : vector<1xf32>
    %35 = vector.multi_reduction <add>, %34, %cst_14 [1, 2] : vector<1x8x1xf32> to vector<1xf32>
    %36 = vector.shape_cast %35 : vector<1xf32> to vector<1x1x1xf32>
    %37 = vector.extract %36[0, 0, 0] : f32 from vector<1x1x1xf32>
    %38 = vector.broadcast %37 : f32 to vector<1x1xf32>
    %39 = arith.addf %33, %38 : vector<1x1xf32>
    %c0_15 = arith.constant 0 : index
    %c0_16 = arith.constant 0 : index
    %40 = vector.load %arg6[%c0_15, %c0_16] : memref<1x1xf32, #tpu.memory_space<vmem>>, vector<1x1xf32>
    tpu.vector_store %arg6[%c0_15, %c0_16], %39 {strides = array<i32>} : memref<1x1xf32, #tpu.memory_space<vmem>>, vector<1x1xf32>,
    %c0_i32_17 = arith.constant 0 : i32
    %41 = arith.cmpi eq, %arg1, %c0_i32_17 : i32
    %42 = arith.extui %41 : i1 to i32
    %c0_i32_18 = arith.constant 0 : i32
    %43 = arith.cmpi ne, %42, %c0_i32_18 : i32
    scf.if %43 {
      %c0_19 = arith.constant 0 : index
      %c0_20 = arith.constant 0 : index
      %44 = vector.load %arg6[%c0_19, %c0_20] : memref<1x1xf32, #tpu.memory_space<vmem>>, vector<1x1xf32>
      %cst_21 = arith.constant 1.250000e-01 : f32
      %45 = vector.broadcast %cst_21 : f32 to vector<1x1xf32>
      %46 = arith.mulf %44, %45 : vector<1x1xf32>
      %47 = vector.shape_cast %46 : vector<1x1xf32> to vector<1x1x1xf32>
      %c0_22 = arith.constant 0 : index
      %c0_23 = arith.constant 0 : index
      %c0_24 = arith.constant 0 : index
      %48 = vector.load %arg5[%c0_22, %c0_23, %c0_24] : memref<1x1x1xf32, #tpu.memory_space<vmem>>, vector<1x1x1xf32>
      tpu.vector_store %arg5[%c0_22, %c0_23, %c0_24], %47 {strides = array<i32>} : memref<1x1x1xf32, #tpu.memory_space<vmem>>, vector<1x1x1xf32>,
    } else {
    }
    return
  }
  func.func @transform_0(%arg0: i32, %arg1: i32) -> (i32, i32) {
    %c1_i32 = arith.constant 1 : i32
    %0 = arith.muli %arg0, %c1_i32 : i32
    %1 = arith.addi %0, %arg1 : i32
    %c0_i32 = arith.constant 0 : i32
    %2 = arith.minsi %1, %c0_i32 : i32
    %c0_i32_0 = arith.constant 0 : i32
    %c0_i32_1 = arith.constant 0 : i32
    return %2, %c0_i32_0 : i32, i32
  }
  func.func @transform_1(%arg0: i32, %arg1: i32) -> (i32, i32) {
    %c1_i32 = arith.constant 1 : i32
    %0 = arith.muli %arg0, %c1_i32 : i32
    %1 = arith.addi %0, %arg1 : i32
    %c0_i32 = arith.constant 0 : i32
    %2 = arith.minsi %1, %c0_i32 : i32
    %c0_i32_0 = arith.constant 0 : i32
    %c0_i32_1 = arith.constant 0 : i32
    return %2, %c0_i32_0 : i32, i32
  }
  func.func @transform_2(%arg0: i32, %arg1: i32) -> (i32, i32) {
    %c1_i32 = arith.constant 1 : i32
    %0 = arith.muli %arg0, %c1_i32 : i32
    %1 = arith.addi %0, %arg1 : i32
    %c0_i32 = arith.constant 0 : i32
    %2 = arith.minsi %1, %c0_i32 : i32
    %c0_i32_0 = arith.constant 0 : i32
    %c0_i32_1 = arith.constant 0 : i32
    return %2, %c0_i32_0 : i32, i32
  }
  func.func @transform_3(%arg0: i32, %arg1: i32) -> (i32, i32, i32) {
    %c0_i32 = arith.constant 0 : i32
    %c0_i32_0 = arith.constant 0 : i32
    %c0_i32_1 = arith.constant 0 : i32
    return %arg0, %c0_i32, %c0_i32_0 : i32, i32, i32
  }
}

</mosaic_0001>

<llo_original>
// kernel: tpu_custom_call.1
$region0: #{tpu_custom_call.1}
  #allocation0 [shape = 'u32[]', space=smem, size = 0x4, offset = 0x4, fixed_abs, tag = 'smem constant byte address 0x4 - core index']
  #allocation1 [shape = 'u32[144,128]{1,0:T(1,128)}', space=vmem, size = 0x12000, scoped, tag = 'internal scratch']
  #allocation2 [shape = 'f32[1,1]{1,0:T(1,128)}', space=vmem, size = 0x200, scoped, tag = 'scratch operand']
  %s0 = inlined_call_operand.vmem [shape: f32[8,32], index: 0, kind: input, shape index: {}]
  %s1 = inlined_call_operand.hbm [shape: f32[8,32], index: 1, kind: input, shape index: {}]
  %s2 = inlined_call_operand.vmem [shape: f32[8,1], index: 2, kind: input, shape index: {}]
  %s3 = inlined_call_operand.vmem [shape: f32[2,1,1], index: 3, kind: output, shape index: {}]
  %s4 = sld [smem:[#allocation0]]
  $region57: #{tpu_custom_call.1} parent=0
    _
  %s6 = ssub.s32 1, %s4
  %s7 = scalar_select 0, %s6, %s4
  $region1: #{tpu_custom_call.1} parent=0
    #allocation3 [shape = 'u8[8192]{0}', space=vmem, size = 0x2000, scoped, tag = 'input window, operand 1']
    #allocation4 [shape = 's32[2]{0}', space=sflag, size = 0x8, scoped, tag = 'scoped memory for tpu_custom_call.1']
    %8 = vsyncpa [#allocation4], 0
    %s9 = scalar_lea.sflag [#allocation4], 1
    %10 = vsyncpa %s9, 0
    loop: start=0, step=1, limit=4
    $region2: #{tpu_custom_call.1} parent=1 // loop_pre_header
      _
    $region3: #{tpu_custom_call.1} parent=1 // loop_header
      %s12 = sphi 0, %s16
      %p13 = scmp.ge.s32.totalorder %s12, 4
      %s19 = sphi 0, %s31
      %s20 = sphi 0, %s27
      %s21 = sphi 0, %s19
      %s22 = sphi 0, %s20
      %s23 = sphi 0, %s21
      %s24 = sphi 0, %s22
      %s40 = sphi 0, %s42
      %s43 = sphi 0, %s40
      %s44 = sphi 0, %s43
      %s60 = sphi 0, %s44
      %s72 = sphi 0, %s74
      %s75 = sphi 0, %s72
      %s76 = sphi 0, %s75
      %s92 = sphi 0, %s76
      %s104 = sphi 0, %s106
      %s107 = sphi 0, %s104
      %s108 = sphi 0, %s107
      %s124 = sphi 0, %s108
      %s130 = sphi 0, %s132
      %s133 = sphi 0, %s130
      %s134 = sphi 0, %s133
      %s150 = sphi 0, %s134
    $region4: #{tpu_custom_call.1} parent=1 // loop_header_branch
      %15 = sbr.rel (%p13) target = $region8
    $region5: #{tpu_custom_call.1} parent=1 // loop_body
      %s17 = ssub.s32 %s12, 1
      %s18 = ssub.s32 %s12, 2
      %s25 = sadd.s32 1, %s20
      %p26 = scmp.ge.s32.totalorder %s25, 1
      %s27 = scalar_select %p26, 0, %s25
      %s28 = sadd.s32 1, %s19
      %s29 = scalar_select %p26, %s28, %s19
      %p30 = scmp.ge.s32.totalorder %s29, 2
      %s31 = scalar_select %p30, 0, %s29
      %s32 = sadd.s32 %s19, %s20
      %p33 = scmp.lt.s32.totalorder %s32, 0
      %s34 = scalar_select %p33, %s32, 0
      %s35 = sadd.s32 %s31, %s27
      %p36 = scmp.lt.s32.totalorder %s35, 0
      %s37 = scalar_select %p36, %s35, 0
      %s38 = ssub.s32 %s34, %s37
      %p39 = scmp.eq.s32.totalorder %s38, 0
      %s41 = sadd.s32 %s40, 1
      %s42 = scalar_select %p39, %s40, %s41
      %p45 = pneg %p39
      %p46 = scmp.eq.s32.totalorder %s12, 1
      %p47 = por %p45, %p46
      %p48 = scmp.ne.s32.totalorder %s40, %s43
      %p49 = scmp.eq.s32.totalorder %s12, 0
      %p50 = por %p48, %p49
      %p51 = scmp.ne.s32.totalorder %s40, %s43
      %p52 = scmp.eq.s32.totalorder %s17, 1
      %p53 = por %p51, %p52
      %p54 = scmp.ne.s32.totalorder %s43, %s44
      %p55 = scmp.eq.s32.totalorder %s17, 0
      %p56 = por %p54, %p55
      %p57 = scmp.ne.s32.totalorder %s43, %s44
      %p58 = scmp.eq.s32.totalorder %s18, 1
      %p59 = por %p57, %p58
      %p61 = scmp.ne.s32.totalorder %s44, %s60
      %p62 = scmp.eq.s32.totalorder %s18, 0
      %p63 = por %p61, %p62
      %s64 = sadd.s32 %s19, %s20
      %p65 = scmp.lt.s32.totalorder %s64, 0
      %s66 = scalar_select %p65, %s64, 0
      %s67 = sadd.s32 %s31, %s27
      %p68 = scmp.lt.s32.totalorder %s67, 0
      %s69 = scalar_select %p68, %s67, 0
      %s70 = ssub.s32 %s66, %s69
      %p71 = scmp.eq.s32.totalorder %s70, 0
      %s73 = sadd.s32 %s72, 1
      %s74 = scalar_select %p71, %s72, %s73
      %p77 = pneg %p71
      %p78 = scmp.eq.s32.totalorder %s12, 1
      %p79 = por %p77, %p78
      %p80 = scmp.ne.s32.totalorder %s72, %s75
      %p81 = scmp.eq.s32.totalorder %s12, 0
      %p82 = por %p80, %p81
      %p83 = scmp.ne.s32.totalorder %s72, %s75
      %p84 = scmp.eq.s32.totalorder %s17, 1
      %p85 = por %p83, %p84
      %p86 = scmp.ne.s32.totalorder %s75, %s76
      %p87 = scmp.eq.s32.totalorder %s17, 0
      %p88 = por %p86, %p87
      %p89 = scmp.ne.s32.totalorder %s75, %s76
      %p90 = scmp.eq.s32.totalorder %s18, 1
      %p91 = por %p89, %p90
      %p93 = scmp.ne.s32.totalorder %s76, %s92
      %p94 = scmp.eq.s32.totalorder %s18, 0
      %p95 = por %p93, %p94
      %s96 = sadd.s32 %s19, %s20
      %p97 = scmp.lt.s32.totalorder %s96, 0
      %s98 = scalar_select %p97, %s96, 0
      %s99 = sadd.s32 %s31, %s27
      %p100 = scmp.lt.s32.totalorder %s99, 0
      %s101 = scalar_select %p100, %s99, 0
      %s102 = ssub.s32 %s98, %s101
      %p103 = scmp.eq.s32.totalorder %s102, 0
      %s105 = sadd.s32 %s104, 1
      %s106 = scalar_select %p103, %s104, %s105
      %p109 = pneg %p103
      %p110 = scmp.eq.s32.totalorder %s12, 1
      %p111 = por %p109, %p110
      %p112 = scmp.ne.s32.totalorder %s104, %s107
      %p113 = scmp.eq.s32.totalorder %s12, 0
      %p114 = por %p112, %p113
      %p115 = scmp.ne.s32.totalorder %s104, %s107
      %p116 = scmp.eq.s32.totalorder %s17, 1
      %p117 = por %p115, %p116
      %p118 = scmp.ne.s32.totalorder %s107, %s108
      %p119 = scmp.eq.s32.totalorder %s17, 0
      %p120 = por %p118, %p119
      %p121 = scmp.ne.s32.totalorder %s107, %s108
      %p122 = scmp.eq.s32.totalorder %s18, 1
      %p123 = por %p121, %p122
      %p125 = scmp.ne.s32.totalorder %s108, %s124
      %p126 = scmp.eq.s32.totalorder %s18, 0
      %p127 = por %p125, %p126
      %s128 = ssub.s32 %s19, %s31
      %p129 = scmp.eq.s32.totalorder %s128, 0
      %s131 = sadd.s32 %s130, 1
      %s132 = scalar_select %p129, %s130, %s131
      %p135 = pneg %p129
      %p136 = scmp.eq.s32.totalorder %s12, 1
      %p137 = por %p135, %p136
      %p138 = scmp.ne.s32.totalorder %s130, %s133
      %p139 = scmp.eq.s32.totalorder %s12, 0
      %p140 = por %p138, %p139
      %p141 = scmp.ne.s32.totalorder %s130, %s133
      %p142 = scmp.eq.s32.totalorder %s17, 1
      %p143 = por %p141, %p142
      %p144 = scmp.ne.s32.totalorder %s133, %s134
      %p145 = scmp.eq.s32.totalorder %s17, 0
      %p146 = por %p144, %p145
      %p147 = scmp.ne.s32.totalorder %s133, %s134
      %p148 = scmp.eq.s32.totalorder %s18, 1
      %p149 = por %p147, %p148
      %p151 = scmp.ne.s32.totalorder %s134, %s150
      %p152 = scmp.eq.s32.totalorder %s18, 0
      %p153 = por %p151, %p152
      %p154 = scmp.le.s32.totalorder 1, %s12
      %p155 = scmp.lt.s32.totalorder %s12, 3
      %p156 = pnand %p154, %p155
      %p157 = pneg %p156
      // Predicated region
      $region9: #{tpu_custom_call.1} parent=5 // pred_check
        _
      $region10: #{tpu_custom_call.1} parent=5 // pred_check_branch
        %159 = sbr.rel (%p156) target = $region12
      $region11: #{tpu_custom_call.1} parent=5 // pred_region
        %s160 = ssub.s32 %s12, 1
      $region12: #{tpu_custom_call.1} parent=5 // pred_fallthru
        _
      %p161 = scmp.lt.s32.totalorder %s12, 2
      // Predicated region
      $region13: #{tpu_custom_call.1} parent=5 // pred_check
        %p162 = pneg %p161
      $region14: #{tpu_custom_call.1} parent=5 // pred_check_branch
        %164 = sbr.rel (%p162) target = $region16
      $region15: #{tpu_custom_call.1} parent=5 // pred_region
        // Predicated region
        $region17: #{tpu_custom_call.1} parent=15 // pred_check
          %p165 = pneg %p50
        $region18: #{tpu_custom_call.1} parent=15 // pred_check_branch
          %167 = sbr.rel (%p165) target = $region20
        $region19: #{tpu_custom_call.1} parent=15 // pred_region
          %s168 = sadd.s32 %s19, %s20
          %p169 = scmp.lt.s32.totalorder %s168, 0
          %s170 = scalar_select %p169, %s168, 0
          %p171 = scmp.lt.s32.totalorder %s170, 0
          %s172 = scalar_select %p171, %s170, 0
          %s173 = smul.addr %s172, 8
          %s174 = scalar_lea.vmem %s0, %s173
          %s175 = sadd.s32 %s19, %s20
          %p176 = scmp.lt.s32.totalorder %s175, 0
          %s177 = scalar_select %p176, %s175, 0
        $region20: #{tpu_custom_call.1} parent=15 // pred_fallthru
          _
        // Predicated region
        $region21: #{tpu_custom_call.1} parent=15 // pred_check
          %p178 = pneg %p82
        $region22: #{tpu_custom_call.1} parent=15 // pred_check_branch
          %180 = sbr.rel (%p178) target = $region24
        $region23: #{tpu_custom_call.1} parent=15 // pred_region
          %s181 = sand.u32 %s72, 1
          %s182 = scalar_lea.sflag [#allocation4], %s181
          %s183 = sand.u32 %s72, 1
          %s184 = smul.addr %s183, 8
          %s185 = scalar_lea.vmem [#allocation3], %s184
          %s186 = sadd.s32 %s19, %s20
          %p187 = scmp.lt.s32.totalorder %s186, 0
          %s188 = scalar_select %p187, %s186, 0
          %s190 = ssub.s32 128, 128
          %191 = vsyncadd %s182, %s190
          %s192 = smul.addr %s188, 128
          %s193 = scalar_lea.hbm %s1, %s192
          %s195 = sshll.u32 %s185, 4
          %s196 = int_to_ptr.vmem [resolvable:$true] %s195
          %198 = dma.hbm_to_vmem [thread:$0]  %s193, 128, %s196, %s182
        $region24: #{tpu_custom_call.1} parent=15 // pred_fallthru
          _
        // Predicated region
        $region25: #{tpu_custom_call.1} parent=15 // pred_check
          %p199 = pneg %p114
        $region26: #{tpu_custom_call.1} parent=15 // pred_check_branch
          %201 = sbr.rel (%p199) target = $region28
        $region27: #{tpu_custom_call.1} parent=15 // pred_region
          %s202 = sadd.s32 %s19, %s20
          %p203 = scmp.lt.s32.totalorder %s202, 0
          %s204 = scalar_select %p203, %s202, 0
          %p205 = scmp.lt.s32.totalorder %s204, 0
          %s206 = scalar_select %p205, %s204, 0
          %s207 = smul.addr %s206, 8
          %s208 = scalar_lea.vmem %s2, %s207
          %s209 = sadd.s32 %s19, %s20
          %p210 = scmp.lt.s32.totalorder %s209, 0
          %s211 = scalar_select %p210, %s209, 0
        $region28: #{tpu_custom_call.1} parent=15 // pred_fallthru
          _
      $region16: #{tpu_custom_call.1} parent=5 // pred_fallthru
        _
      %p212 = scmp.le.s32.totalorder 1, %s12
      %p213 = scmp.lt.s32.totalorder %s12, 3
      %p214 = pnand %p212, %p213
      %p215 = pneg %p214
      // Predicated region
      $region29: #{tpu_custom_call.1} parent=5 // pred_check
        _
      $region30: #{tpu_custom_call.1} parent=5 // pred_check_branch
        %217 = sbr.rel (%p214) target = $region32
      $region31: #{tpu_custom_call.1} parent=5 // pred_region
        %s218 = ssub.s32 %s12, 1
        %s219 = sand.u32 %s75, 1
        %s220 = scalar_lea.sflag [#allocation4], %s219
        %s221 = sand.u32 %s75, 1
        %s222 = smul.addr %s221, 8
        %s223 = scalar_lea.vmem [#allocation3], %s222
        // Predicated region
        $region33: #{tpu_custom_call.1} parent=31 // pred_check
          %p224 = pneg %p88
        $region34: #{tpu_custom_call.1} parent=31 // pred_check_branch
          %226 = sbr.rel (%p224) target = $region36
        $region35: #{tpu_custom_call.1} parent=31 // pred_region
          %227 = dma.done %s220, 128
        $region36: #{tpu_custom_call.1} parent=31 // pred_fallthru
          _
        %s228 = sadd.s32 %s21, %s22
        %p229 = scmp.lt.s32.totalorder %s228, 0
        %s230 = scalar_select %p229, %s228, 0
        %p231 = scmp.lt.s32.totalorder %s230, 0
        %s232 = scalar_select %p231, %s230, 0
        %s233 = smul.addr %s232, 8
        %s234 = scalar_lea.vmem %s0, %s233
        %p235 = pneg %p56
        %p236 = pneg %p53
        %s237 = sand.u32 %s75, 1
        %s238 = scalar_lea.sflag [#allocation4], %s237
        %s239 = sand.u32 %s75, 1
        %s240 = smul.addr %s239, 8
        %s241 = scalar_lea.vmem [#allocation3], %s240
        %p242 = pneg %p88
        %p243 = pneg %p85
        %s244 = sadd.s32 %s21, %s22
        %p245 = scmp.lt.s32.totalorder %s244, 0
        %s246 = scalar_select %p245, %s244, 0
        %p247 = scmp.lt.s32.totalorder %s246, 0
        %s248 = scalar_select %p247, %s246, 0
        %s249 = smul.addr %s248, 8
        %s250 = scalar_lea.vmem %s2, %s249
        %p251 = pneg %p120
        %p252 = pneg %p117
        %p253 = pneg %p146
        %p254 = pneg %p143
        %p255 = scmp.lt.s32.totalorder %s21, 1
        %s256 = scalar_select %p255, %s21, 1
        %s257 = scalar_lea.vmem %s3, %s256
        %s258 = sadd.s32 %s21, %s22
        %p259 = scmp.lt.s32.totalorder %s258, 0
        %s260 = scalar_select %p259, %s258, 0
        %p261 = scmp.lt.s32.totalorder %s260, 0
        %s262 = scalar_select %p261, %s260, 0
        %s263 = smul.addr %s262, 8
        %s264 = scalar_lea.vmem %s0, %s263
        %s265 = sadd.s32 %s21, %s22
        %p266 = scmp.lt.s32.totalorder %s265, 0
        %s267 = scalar_select %p266, %s265, 0
        %s268 = sadd.s32 %s21, %s22
        %p269 = scmp.lt.s32.totalorder %s268, 0
        %s270 = scalar_select %p269, %s268, 0
        %s271 = sadd.s32 %s21, %s22
        %p272 = scmp.lt.s32.totalorder %s271, 0
        %s273 = scalar_select %p272, %s271, 0
        %p274 = scmp.lt.s32.totalorder %s273, 0
        %s275 = scalar_select %p274, %s273, 0
        %s276 = smul.addr %s275, 8
        %s277 = scalar_lea.vmem %s2, %s276
        %s278 = sadd.s32 %s21, %s22
        %p279 = scmp.lt.s32.totalorder %s278, 0
        %s280 = scalar_select %p279, %s278, 0
        %p281 = scmp.lt.s32.totalorder %s21, 1
        %s282 = scalar_select %p281, %s21, 1
        %s283 = scalar_lea.vmem %s3, %s282
        %p284 = scmp.eq.s32.totalorder %s22, 0
        // Predicated region
        $region37: #{tpu_custom_call.1} parent=31 // pred_check
          %p285 = pneg %p284
        $region38: #{tpu_custom_call.1} parent=31 // pred_check_branch
          %287 = sbr.rel (%p285) target = $region40
        $region39: #{tpu_custom_call.1} parent=31 // pred_region
          %vm288 = vcmask 0
          %289 = vst.msk [vmem:[#allocation2] sm:$0x1] %vm288, 0.0
        $region40: #{tpu_custom_call.1} parent=31 // pred_fallthru
          _
        %v290 = vld [vmem:[%s264] sm:$0xff]
        %v291 = vld [vmem:[%s223] sm:$0xff]
        %v292 = vsub.f32 %v290, %v291
        %v293 = vadd.f32 %v292, 1e-06
        %v294 = vld [vmem:[%s277] sm:$0xff]
        %v295 = vmul.f32 %v293, %v293
        %vm296 = vcmask 261120
        %v297 = vsel %vm296, %v295, 0.0
        %298 = vadd.xlane.f32.xlu0 %v297
        %v299 = vpop.xlane.xlu0 %298
        %v300 = vrsqrt.pop %v299
        %v301 = vmul.f32 %v299, %v300
        %vm302 = vcmp.eq.f32.partialorder %v299, inf
        %v303 = vsel %vm302, %v299, %v301
        %vm304 = vcmp.eq.f32.partialorder %v299, 0.0
        %v305 = vand.u32 %v299, 2147483648
        %v306 = vsel %vm304, %v305, %v303
        %v307 = vsub.f32 2.0, %v306
        %v308 = vmax.f32 %v307, 0.0
        %v309 = vmul.f32 %v294, %v299
        %v310 = vsub.f32 1.0, %v294
        %v311 = vmul.f32 %v308, %v308
        %v312 = vmul.f32 %v310, %v311
        %v313 = vadd.f32 %v309, %v312
        %s314 = sadd.s32 %s21, %s22
        %s315 = smul.u32 %s314, 8
        %v316 = vlaneseq
        %v317 = vshrl.u32 %v316, 7
        %v318 = vstv %s315
        %v319 = vadd.s32 %v317, %v318
        %vm320 = vcmp.lt.s32.totalorder %v319, 8
        %v321 = vsel %vm320, %v313, 0.0
        %v322 = vld [vmem:[#allocation2] sm:$0x1]
        %vm323 = vcmask 7168
        %v324 = vsel %vm323, %v321, 0.0
        %325 = vadd.xlane.f32.xlu0 %v324
        %v326 = vpop.xlane.xlu0 %325
        %v327 = vrot.slane %v326, 4
        %v328 = vadd.f32 %v326, %v327
        %v329 = vrot.slane %v328, 2
        %v330 = vadd.f32 %v328, %v329
        %v331 = vrot.slane %v330, 1
        %v332 = vadd.f32 %v330, %v331
        %s333 = vtos %v332
        %v334 = vstv %s333
        %v335 = vadd.f32 %v322, %v334
        %vm336 = vcmask 0
        %337 = vst.msk [vmem:[#allocation2] sm:$0x1] %vm336, %v335
        // Predicated region
        $region41: #{tpu_custom_call.1} parent=31 // pred_check
          %p338 = pneg %p284
        $region42: #{tpu_custom_call.1} parent=31 // pred_check_branch
          %340 = sbr.rel (%p338) target = $region44
        $region43: #{tpu_custom_call.1} parent=31 // pred_region
          %v341 = vld [vmem:[#allocation2] sm:$0x1]
          %v342 = vmul.f32 %v341, 0.125
          %343 = vst.msk [vmem:[%s283] sm:$0x1] %vm336, %v342
        $region44: #{tpu_custom_call.1} parent=31 // pred_fallthru
          _
        %p344 = scmp.lt.s32.totalorder %s21, 1
        %s345 = scalar_select %p344, %s21, 1
        %s346 = scalar_lea.vmem %s3, %s345
        // Predicated region
        $region45: #{tpu_custom_call.1} parent=31 // pred_check
          %p347 = pneg %p143
        $region46: #{tpu_custom_call.1} parent=31 // pred_check_branch
          %349 = sbr.rel (%p347) target = $region48
        $region47: #{tpu_custom_call.1} parent=31 // pred_region
          _
        $region48: #{tpu_custom_call.1} parent=31 // pred_fallthru
          _
      $region32: #{tpu_custom_call.1} parent=5 // pred_fallthru
        _
      %p350 = scmp.le.s32.totalorder 2, %s12
      // Predicated region
      $region49: #{tpu_custom_call.1} parent=5 // pred_check
        %p351 = pneg %p350
      $region50: #{tpu_custom_call.1} parent=5 // pred_check_branch
        %353 = sbr.rel (%p351) target = $region52
      $region51: #{tpu_custom_call.1} parent=5 // pred_region
        %s354 = ssub.s32 %s12, 2
        // Predicated region
        $region53: #{tpu_custom_call.1} parent=51 // pred_check
          %p355 = pneg %p149
        $region54: #{tpu_custom_call.1} parent=51 // pred_check_branch
          %357 = sbr.rel (%p355) target = $region56
        $region55: #{tpu_custom_call.1} parent=51 // pred_region
          %p358 = scmp.lt.s32.totalorder %s23, 1
          %s359 = scalar_select %p358, %s23, 1
          %s360 = scalar_lea.vmem %s3, %s359
        $region56: #{tpu_custom_call.1} parent=51 // pred_fallthru
          _
      $region52: #{tpu_custom_call.1} parent=5 // pred_fallthru
        _
    $region6: #{tpu_custom_call.1} parent=1 // loop_footer
      %s16 = sadd.s32 1, %s12
    $region7: #{tpu_custom_call.1} parent=1 // loop_footer_branch
      %11 = sbr.rel target = $region3
    $region8: #{tpu_custom_call.1} parent=1 // loop_exit
      _
    %361 = vsyncpa [#allocation4], 1
    %s362 = scalar_lea.sflag [#allocation4], 1
    %363 = vsyncpa %s362, 1

</llo_original>
